<compile_context>
chip_gen: v7x
topology: tpu7x:2x2x1
jax: 0.10.0
libtpu: 0.0.40
codegen_flags: <defaults>
</compile_context>

<pallas_src>
import math

import jax
import jax.numpy as jnp
from jax.experimental import pallas as pl
from jax.experimental.pallas import tpu as pltpu


# ----------------------------------------------------------------------------
# Deterministic DCT filter construction (mirrors get_dct_filter / build_filter)
# ----------------------------------------------------------------------------
def _build_filter_1d(freq: int, pos_count: int) -> jnp.ndarray:
    pos = jnp.arange(pos_count, dtype=jnp.float32)
    res = jnp.cos(math.pi * freq * (pos + 0.5) / pos_count) / math.sqrt(pos_count)
    if freq != 0:
        res = res * math.sqrt(2.0)
    return res  # (pos_count,)


def build_dct_filter_bank(height, width, mapper_x, mapper_y) -> jnp.ndarray:
    """Compact (num_freq, H*W) DCT filter bank -- no per-channel broadcast."""
    assert len(mapper_x) == len(mapper_y)
    rows = []
    for u_x, v_y in zip(mapper_x, mapper_y):
        fx = _build_filter_1d(u_x, height)                 # (H,)
        fy = _build_filter_1d(v_y, width)                  # (W,)
        rows.append((fx[:, None] * fy[None, :]).reshape(-1))
    return jnp.stack(rows, axis=0)                         # (F, H*W)


def build_channel_onehot(channel, num_freq, dtype=jnp.float32) -> jnp.ndarray:
    """(C, F) one-hot map: channel c uses frequency group c // (C // F)."""
    assert channel % num_freq == 0
    group = jnp.arange(channel) // (channel // num_freq)
    return jax.nn.one_hot(group, num_freq, dtype=dtype)


def get_dct_filter(height, width, mapper_x, mapper_y, channel) -> jnp.ndarray:
    """Full (C, H, W) weight built exactly like the PyTorch module (reference only)."""
    assert channel % len(mapper_x) == 0
    c_part = channel // len(mapper_x)
    parts = []
    for u_x, v_y in zip(mapper_x, mapper_y):
        fx = _build_filter_1d(u_x, height)
        fy = _build_filter_1d(v_y, width)
        filt_2d = fx[:, None] * fy[None, :]
        parts.append(jnp.broadcast_to(filt_2d, (c_part, height, width)))
    return jnp.concatenate(parts, axis=0)                  # (C, H, W)


# ----------------------------------------------------------------------------
# Pallas kernel: one MXU contraction over the spatial axis + one-hot select
# ----------------------------------------------------------------------------
def _dct_pool_kernel(x_ref, fb_ref, oh_ref, o_ref):
    # x_ref : (TN, C, HW)   batch tile of the input, HW on lanes
    # fb_ref: (F, HW)       compact DCT filter bank (resident across the grid)
    # oh_ref: (C, F)        one-hot channel -> frequency-group map (f32)
    # o_ref : (TN, C)       pooled output tile (lane-dense)
    x = x_ref[...]
    fb = fb_ref[...]

    # Single contraction over the spatial axis with f32 accumulation.  No
    # batch dims: Mosaic flattens (TN, C) into one matmul M dimension, so the
    # whole tile is one large MXU op instead of TN small batched matmuls.
    s = jnp.einsum("nck,fk->ncf", x, fb,
                   preferred_element_type=jnp.float32)      # (TN, C, F) f32

    # Per-channel frequency selection (exact one-hot multiply) and reduction
    # over the tiny F axis; store the lane-dense (TN, C) result.
    out = jnp.sum(s * oh_ref[...][None, :, :], axis=-1)
    o_ref[...] = out.astype(o_ref.dtype)


def _pick_batch_tile(n, c, hw, itemsize, max_tn=32):
    """Batch-tile size: sublane-full for the dtype (8 for f32, 16 for bf16),
    grown while the double-buffered x tile + padded f32 matmul result stay
    within a conservative VMEM budget (safe for v7x's 64 MiB VMEM and v5e's
    small scoped default) and the grid keeps >= 2 steps (megacore)."""
    min_sub = max(8, 32 // itemsize)      # f32 -> 8, bf16 -> 16, int8/fp8 -> 32
    if n <= min_sub:
        return n                          # full-extent batch block (always legal)
    tn = min_sub
    budget = 12 * 1024 * 1024             # bytes for x (double buffered) + (TN,C,F) temp

    def need(t):
        return 2 * t * c * hw * itemsize + t * c * 128 * 4   # F lane-padded to 128

    while tn * 2 <= max_tn and tn * 2 <= n // 2 and need(tn * 2) <= budget:
        tn *= 2
    return tn


def multispectral_dct_layer(x, filter_bank, channel_onehot, *, max_tn=32):
    """x: (N, C, H, W); filter_bank: (F, H*W); channel_onehot: (C, F) -> (N, C).

    Equivalent to torch.sum(x * weight, dim=[2, 3]) with
    weight[c] = filter_bank[argmax(channel_onehot[c])].
    """
    n, c, h, w = x.shape
    f, hw = filter_bank.shape
    assert hw == h * w
    assert channel_onehot.shape == (c, f)

    x_flat = x.reshape(n, c, hw)
    fb = filter_bank.astype(x.dtype)
    oh = channel_onehot.astype(jnp.float32)

    itemsize = jnp.dtype(x.dtype).itemsize
    tn = _pick_batch_tile(n, c, hw, itemsize, max_tn=max_tn)
    grid = (pl.cdiv(n, tn),)

    # Advisory cost estimate: bandwidth-bound op.
    bytes_accessed = int((x_flat.size + fb.size) * itemsize
                         + oh.size * 4 + n * c * itemsize)
    cost = pl.CostEstimate(flops=2 * n * c * hw * f + 2 * n * c * f,
                           transcendentals=0,
                           bytes_accessed=bytes_accessed)

    # Explicit VMEM limit: double-buffered x/out tiles + resident compact
    # weights + the lane-padded f32 matmul result, with generous headroom.
    est = (2 * tn * c * hw * itemsize   # x tile, double buffered
           + 2 * tn * c * itemsize      # out tile, double buffered
           + 2 * f * hw * itemsize      # compact filter bank
           + 2 * c * f * 4              # one-hot map (f32)
           + tn * c * 128 * 4)          # (TN, C, F) matmul result (lane padded)
    vmem_limit = int(min(64 * 2**20, max(32 * 2**20, 2 * est)))

    return pl.pallas_call(
        _dct_pool_kernel,
        out_shape=jax.ShapeDtypeStruct((n, c), x.dtype),
        grid_spec=pltpu.PrefetchScalarGridSpec(
            num_scalar_prefetch=0,
            grid=grid,
            in_specs=[
                pl.BlockSpec((tn, c, hw), lambda i: (i, 0, 0)),   # batch tile of x
                pl.BlockSpec((f, hw), lambda i: (0, 0)),          # resident filter bank
                pl.BlockSpec((c, f), lambda i: (0, 0)),           # resident one-hot map
            ],
            out_specs=pl.BlockSpec((tn, c), lambda i: (i, 0)),    # lane-dense output
        ),
        compiler_params=pltpu.CompilerParams(
            dimension_semantics=("parallel",),
            vmem_limit_bytes=vmem_limit,
        ),
        cost_estimate=cost,
    )(x_flat, fb, oh)


if __name__ == "__main__":
    # Small deterministic configuration consistent with the module
    # (channel must be divisible by num_freq).
    N, C, H, W = 2, 16, 16, 16
    mapper_x = [0, 1, 2, 3]
    mapper_y = [0, 1, 2, 3]
    F = len(mapper_x)

    bank = build_dct_filter_bank(H, W, mapper_x, mapper_y)       # (F, H*W)
    onehot = build_channel_onehot(C, F)                          # (C, F)
    group = jnp.arange(C) // (C // F)

    # Sanity: compact bank + grouping reproduces the PyTorch-style full weight.
    w_pt = get_dct_filter(H, W, mapper_x, mapper_y, C)           # (C, H, W)
    assert jnp.allclose(jnp.take(bank, group, axis=0).reshape(C, H, W), w_pt,
                        atol=1e-6, rtol=1e-6)

    key = jax.random.PRNGKey(0)
    x = jax.random.normal(key, (N, C, H, W), dtype=jnp.float32)

    # Round demo inputs to bf16-representable f32 values so the kernel-vs-
    # reference check is independent of the MXU's default matmul precision
    # (products of bf16-representable values are exact in the f32 accumulator).
    x = x.astype(jnp.bfloat16).astype(jnp.float32)
    bank = bank.astype(jnp.bfloat16).astype(jnp.float32)

    out = multispectral_dct_layer(x, bank, onehot)
    out = jax.block_until_ready(out)

    # Pure-JAX reference with the exactly-expanded full weight.
    w_ref = jnp.take(bank, group, axis=0).reshape(C, H, W)
    ref = jnp.sum(x * w_ref[None, :, :, :], axis=(2, 3))

    assert out.shape == (N, C)
    assert jnp.allclose(out, ref, atol=1e-4, rtol=1e-4), "mismatch vs reference"

    print("KERNEL_OK")
</pallas_src>

<mosaic_0001>
module attributes {stable_mosaic.version = 11 : i64} {
  func.func @_dct_pool_kernel(%arg0: i32, %arg1: memref<2x16x256xf32, #tpu.memory_space<vmem>>, %arg2: memref<4x256xf32, #tpu.memory_space<vmem>>, %arg3: memref<16x4xf32, #tpu.memory_space<vmem>>, %arg4: memref<2x16xf32, #tpu.memory_space<vmem>>) attributes {dimension_semantics = [#tpu.dimension_semantics<parallel>], iteration_bounds = array<i64: 1>, scalar_prefetch = 0 : i64, scratch_operands = 0 : i64, tpu.core_type = #tpu.core_type<tc>, window_params = [{transform_indices = @transform_0, window_bounds = array<i64: 2, 16, 256>}, {pipeline_mode = #tpu.pipeline_mode<synchronous>, transform_indices = @transform_1, window_bounds = array<i64: 4, 256>}, {pipeline_mode = #tpu.pipeline_mode<synchronous>, transform_indices = @transform_2, window_bounds = array<i64: 16, 4>}, {transform_indices = @transform_3, window_bounds = array<i64: 2, 16>}]} {
    %c0 = arith.constant 0 : index
    %c0_0 = arith.constant 0 : index
    %c0_1 = arith.constant 0 : index
    %0 = vector.load %arg1[%c0, %c0_0, %c0_1] : memref<2x16x256xf32, #tpu.memory_space<vmem>>, vector<2x16x256xf32>
    %c0_2 = arith.constant 0 : index
    %c0_3 = arith.constant 0 : index
    %1 = vector.load %arg2[%c0_2, %c0_3] : memref<4x256xf32, #tpu.memory_space<vmem>>, vector<4x256xf32>
    "tpu.trace_start"() <{level = 10 : i32, message = "nck,fk->ncf"}> : () -> ()
    %cst = arith.constant dense<0.000000e+00> : vector<2x16x4xf32>
    %2 = tpu.matmul %0, %1, %cst {dimension_numbers = #tpu.dot_dimension_numbers<[2], [1], [0, 1], [0], [0, 0, 0, 1, 1, 0], [], []>} : vector<2x16x256xf32>, vector<4x256xf32>, vector<2x16x4xf32> -> vector<2x16x4xf32>
    "tpu.trace_stop"() : () -> ()
    %c0_4 = arith.constant 0 : index
    %c0_5 = arith.constant 0 : index
    %3 = vector.load %arg3[%c0_4, %c0_5] : memref<16x4xf32, #tpu.memory_space<vmem>>, vector<16x4xf32>
    %4 = vector.shape_cast %3 : vector<16x4xf32> to vector<1x16x4xf32>
    %5 = vector.broadcast %4 : vector<1x16x4xf32> to vector<2x16x4xf32>
    %6 = arith.mulf %2, %5 : vector<2x16x4xf32>
    %cst_6 = arith.constant dense<0.000000e+00> : vector<2x16xf32>
    %7 = vector.multi_reduction <add>, %6, %cst_6 [2] : vector<2x16x4xf32> to vector<2x16xf32>
    %c0_7 = arith.constant 0 : index
    %c0_8 = arith.constant 0 : index
    %8 = vector.load %arg4[%c0_7, %c0_8] : memref<2x16xf32, #tpu.memory_space<vmem>>, vector<2x16xf32>
    tpu.vector_store %arg4[%c0_7, %c0_8], %7 {strides = array<i32>} : memref<2x16xf32, #tpu.memory_space<vmem>>, vector<2x16xf32>,
    return
  }
  func.func @transform_0(%arg0: i32) -> (i32, i32, i32) {
    %c0_i32 = arith.constant 0 : i32
    %c0_i32_0 = arith.constant 0 : i32
    %c0_i32_1 = arith.constant 0 : i32
    return %arg0, %c0_i32, %c0_i32_0 : i32, i32, i32
  }
  func.func @transform_1(%arg0: i32) -> (i32, i32) {
    %c0_i32 = arith.constant 0 : i32
    %c0_i32_0 = arith.constant 0 : i32
    %c0_i32_1 = arith.constant 0 : i32
    return %c0_i32, %c0_i32_0 : i32, i32
  }
  func.func @transform_2(%arg0: i32) -> (i32, i32) {
    %c0_i32 = arith.constant 0 : i32
    %c0_i32_0 = arith.constant 0 : i32
    %c0_i32_1 = arith.constant 0 : i32
    return %c0_i32, %c0_i32_0 : i32, i32
  }
  func.func @transform_3(%arg0: i32) -> (i32, i32) {
    %c0_i32 = arith.constant 0 : i32
    %c0_i32_0 = arith.constant 0 : i32
    return %arg0, %c0_i32 : i32, i32
  }
}

</mosaic_0001>

<llo_original>
// kernel: tpu_custom_call.1
$region0: #{tpu_custom_call.1}
  #allocation0 [shape = 'u32[]', space=smem, size = 0x4, offset = 0x4, fixed_abs, tag = 'smem constant byte address 0x4 - core index']
  #allocation1 [shape = 'u32[144,128]{1,0:T(1,128)}', space=vmem, size = 0x12000, scoped, tag = 'internal scratch']
  %s0 = inlined_call_operand.hbm [shape: f32[2,16,256], index: 0, kind: input, shape index: {}]
  %s1 = inlined_call_operand.vmem [shape: f32[4,256], index: 1, kind: input, shape index: {}]
  %s2 = inlined_call_operand.vmem [shape: f32[16,4], index: 2, kind: input, shape index: {}]
  %s3 = inlined_call_operand.hbm [shape: f32[2,16], index: 3, kind: output, shape index: {}]
  %s4 = sld [smem:[#allocation0]]
  $region26: #{tpu_custom_call.1} parent=0
    _
  %s6 = ssub.s32 1, %s4
  %s7 = scalar_select 0, %s6, %s4
  $region1: #{tpu_custom_call.1} parent=0
    #allocation2 [shape = 'u8[32768]{0}', space=vmem, size = 0x8000, scoped, tag = 'input window, operand 0, single buffered']
    #allocation3 [shape = 's32[1]{0}', space=sflag, size = 0x4, scoped, tag = 'scoped memory for tpu_custom_call.1']
    #allocation4 [shape = 's32[1]{0}', space=sflag, size = 0x4, scoped, tag = 'scoped memory for tpu_custom_call.1']
    #allocation5 [shape = 'u8[1024]{0}', space=vmem, size = 0x400, scoped, tag = 'output window, operand 0, single buffered']
    %8 = vsyncpa [#allocation3], 0
    %9 = vsyncpa [#allocation4], 0
    // Predicated region
    $region2: #{tpu_custom_call.1} parent=1 // pred_check
      _
    $region3: #{tpu_custom_call.1} parent=1 // pred_check_branch
      %11 = sbr.rel (0) target = $region5
    $region4: #{tpu_custom_call.1} parent=1 // pred_region
      %s13 = ssub.s32 1024, 1024
      %14 = vsyncadd [#allocation3], %s13
      %s15 = sshll.u32 [#allocation2], 4
      %s16 = int_to_ptr.vmem [resolvable:$true] %s15
      %21 = dma.hbm_to_vmem [thread:$0]  %s0, 1024, %s16, [#allocation3], 256, 256, 16
    $region5: #{tpu_custom_call.1} parent=1 // pred_fallthru
      _
    // Predicated region
    $region6: #{tpu_custom_call.1} parent=1 // pred_check
      _
    $region7: #{tpu_custom_call.1} parent=1 // pred_check_branch
      %23 = sbr.rel (0) target = $region9
    $region8: #{tpu_custom_call.1} parent=1 // pred_region
      _
    $region9: #{tpu_custom_call.1} parent=1 // pred_fallthru
      _
    // Predicated region
    $region10: #{tpu_custom_call.1} parent=1 // pred_check
      _
    $region11: #{tpu_custom_call.1} parent=1 // pred_check_branch
      %25 = sbr.rel (0) target = $region13
    $region12: #{tpu_custom_call.1} parent=1 // pred_region
      _
    $region13: #{tpu_custom_call.1} parent=1 // pred_fallthru
      _
    // Predicated region
    $region14: #{tpu_custom_call.1} parent=1 // pred_check
      _
    $region15: #{tpu_custom_call.1} parent=1 // pred_check_branch
      %27 = sbr.rel (0) target = $region17
    $region16: #{tpu_custom_call.1} parent=1 // pred_region
      %28 = dma.done [#allocation3], 1024
    $region17: #{tpu_custom_call.1} parent=1 // pred_fallthru
      _
    %v29 = vld [vmem:[#allocation2] sm:$0xff]
    %v30 = vld [vmem:[#allocation2 + $0x8] sm:$0xff]
    %v31 = vld [vmem:[#allocation2 + $0x10] sm:$0xff]
    %v32 = vld [vmem:[#allocation2 + $0x18] sm:$0xff]
    %v33 = vld [vmem:[#allocation2 + $0x20] sm:$0xff]
    %v34 = vld [vmem:[#allocation2 + $0x28] sm:$0xff]
    %v35 = vld [vmem:[#allocation2 + $0x30] sm:$0xff]
    %v36 = vld [vmem:[#allocation2 + $0x38] sm:$0xff]
    %v37 = vld [vmem:[%s1] sm:$0xff]
    %v39 = vcombine.high %v37, %v37
    %41 = vmatprep.subr.mxu0 %v39
    %42 = vmatpush1.xpose.msra.mxu0 %v37
    %43 = vmatprep.subr.mxu0 0.0
    %44 = vmatpush1.xpose.msra.mxu0 0.0
    %45 = vmatprep.subr.mxu0 0.0
    %46 = vmatpush1.xpose.msra.mxu0 0.0
    %47 = vmatprep.subr.mxu0 0.0
    %48 = vmatpush1.xpose.msra.mxu0 0.0
    %49 = vmatprep.subr.mxu0 0.0
    %50 = vmatpush1.xpose.msra.mxu0 0.0
    %51 = vmatprep.subr.mxu0 0.0
    %52 = vmatpush1.xpose.msra.mxu0 0.0
    %53 = vmatprep.subr.mxu0 0.0
    %54 = vmatpush1.xpose.msra.mxu0 0.0
    %55 = vmatprep.subr.mxu0 0.0
    %56 = vmatpush1.xpose.msra.mxu0 0.0
    %57 = vmatprep.subr.mxu0 0.0
    %58 = vmatpush1.xpose.msra.mxu0 0.0
    %59 = vmatprep.subr.mxu0 0.0
    %60 = vmatpush1.xpose.msra.mxu0 0.0
    %61 = vmatprep.subr.mxu0 0.0
    %62 = vmatpush1.xpose.msra.mxu0 0.0
    %63 = vmatprep.subr.mxu0 0.0
    %64 = vmatpush1.xpose.msra.mxu0 0.0
    %65 = vmatprep.subr.mxu0 0.0
    %66 = vmatpush1.xpose.msra.mxu0 0.0
    %67 = vmatprep.subr.mxu0 0.0
    %68 = vmatpush1.xpose.msra.mxu0 0.0
    %69 = vmatprep.subr.mxu0 0.0
    %70 = vmatpush1.xpose.msra.mxu0 0.0
    %71 = vmatprep.subr.mxu0 0.0
    %72 = vmatpush1.xpose.msra.mxu0 0.0
    %73 = vmatprep.subr.mxu0 0.0
    %74 = vmatpush1.xpose.msra.mxu0 0.0
    %75 = vmatprep.subr.mxu0 0.0
    %76 = vmatpush1.xpose.msra.mxu0 0.0
    %77 = vmatprep.subr.mxu0 0.0
    %78 = vmatpush1.xpose.msra.mxu0 0.0
    %79 = vmatprep.subr.mxu0 0.0
    %80 = vmatpush1.xpose.msra.mxu0 0.0
    %81 = vmatprep.subr.mxu0 0.0
    %82 = vmatpush1.xpose.msra.mxu0 0.0
    %83 = vmatprep.subr.mxu0 0.0
    %84 = vmatpush1.xpose.msra.mxu0 0.0
    %85 = vmatprep.subr.mxu0 0.0
    %86 = vmatpush1.xpose.msra.mxu0 0.0
    %87 = vmatprep.subr.mxu0 0.0
    %88 = vmatpush1.xpose.msra.mxu0 0.0
    %89 = vmatprep.subr.mxu0 0.0
    %90 = vmatpush1.xpose.msra.mxu0 0.0
    %91 = vmatprep.subr.mxu0 0.0
    %92 = vmatpush1.xpose.msra.mxu0 0.0
    %93 = vmatprep.subr.mxu0 0.0
    %94 = vmatpush1.xpose.msra.mxu0 0.0
    %95 = vmatprep.subr.mxu0 0.0
    %96 = vmatpush1.xpose.msra.mxu0 0.0
    %97 = vmatprep.subr.mxu0 0.0
    %98 = vmatpush1.xpose.msra.mxu0 0.0
    %99 = vmatprep.subr.mxu0 0.0
    %100 = vmatpush1.xpose.msra.mxu0 0.0
    %101 = vmatprep.subr.mxu0 0.0
    %102 = vmatpush1.xpose.msra.mxu0 0.0
    %103 = vmatprep.subr.mxu0 0.0
    %104 = vmatpush1.xpose.msra.mxu0 0.0
    %105 = vmatprep.mubr.f32.mxu0 %v30
    %106 = vmatmul.mubr.f32.gmra.mrb[0].mxu0 %v29
    %v107 = vpop.f32.mrb[0].mxu0
    %v108 = vadd.f32 0.0, %v107
    %v109 = vpop.f32.mrb[0].mxu0
    %110 = vmatprep.mubr.f32.mxu0 %v32
    %111 = vmatmul.mubr.f32.gmra.mrb[0].mxu0 %v31
    %v112 = vpop.f32.mrb[0].mxu0
    %v113 = vadd.f32 0.0, %v112
    %v114 = vpop.f32.mrb[0].mxu0
    %115 = vmatprep.mubr.f32.mxu0 %v34
    %116 = vmatmul.mubr.f32.gmra.mrb[0].mxu0 %v33
    %v117 = vpop.f32.mrb[0].mxu0
    %v118 = vadd.f32 0.0, %v117
    %v119 = vpop.f32.mrb[0].mxu0
    %120 = vmatprep.mubr.f32.mxu0 %v36
    %121 = vmatmul.mubr.f32.gmra.mrb[0].mxu0 %v35
    %v122 = vpop.f32.mrb[0].mxu0
    %v123 = vadd.f32 0.0, %v122
    %v124 = vpop.f32.mrb[0].mxu0
    %125 = vdwg.mxu0
    %v126 = vld [vmem:[%s2] sm:$0xff]
    %v127 = vld [vmem:[%s2 + $0x8] sm:$0xff]
    %v128 = vmul.f32 %v108, %v126
    %v129 = vmul.f32 %v113, %v127
    %v130 = vmul.f32 %v118, %v126
    %v131 = vmul.f32 %v123, %v127
    %vm132 = vcmask 31744
    %v133 = vsel %vm132, %v128, 0.0
    %134 = vadd.xlane.f32.xlu0 %v133
    %v135 = vpop.xlane.xlu0 %134
    %v136 = vsel %vm132, %v129, 0.0
    %137 = vadd.xlane.f32.xlu0 %v136
    %v138 = vpop.xlane.xlu0 %137
    %v139 = vsel %vm132, %v130, 0.0
    %140 = vadd.xlane.f32.xlu0 %v139
    %v141 = vpop.xlane.xlu0 %140
    %v142 = vsel %vm132, %v131, 0.0
    %143 = vadd.xlane.f32.xlu0 %v142
    %v144 = vpop.xlane.xlu0 %143
    %v149 = vlaneseq
    %v150 = vand.u32 %v149, 127
    %v151 = vlaneseq
    %v152 = vshrl.u32 %v151, 7
    %v153 = vsub.s32 %v150, %v152
    %v154 = vrot.slane %v135, %v153
    %v155 = vadd.s32 %v150, 4294967288
    %v156 = vlaneseq
    %v157 = vshrl.u32 %v156, 7
    %v158 = vsub.s32 %v155, %v157
    %v159 = vrot.slane %v138, %v158
    %vm160 = vcmask 130112
    %v161 = vsel %vm160, %v159, %v154
    %v162 = vlaneseq
    %v163 = vshrl.u32 %v162, 7
    %v164 = vsub.s32 %v150, %v163
    %v165 = vrot.slane %v141, %v164
    %v166 = vlaneseq
    %v167 = vshrl.u32 %v166, 7
    %v168 = vsub.s32 %v155, %v167
    %v169 = vrot.slane %v144, %v168
    %v170 = vsel %vm160, %v169, %v165
    %vm171 = vcmask 1041409
    %v172 = vsel %vm171, %v170, %v161
    %vm174 = vcmask 123904
    %175 = vst.msk [vmem:[#allocation5] sm:$0x3] %vm174, %v172
    // Predicated region
    $region18: #{tpu_custom_call.1} parent=1 // pred_check
      _
    $region19: #{tpu_custom_call.1} parent=1 // pred_check_branch
      %177 = sbr.rel (0) target = $region21
    $region20: #{tpu_custom_call.1} parent=1 // pred_region
      %s179 = ssub.s32 32, 32
      %180 = vsyncadd [#allocation4], %s179
      %s182 = sshll.u32 [#allocation5], 4
      %s183 = int_to_ptr.vmem [resolvable:$true] %s182
      %185 = dma.vmem_to_hbm [thread:$0]  %s183, 32, %s3, [#allocation4]
    $region21: #{tpu_custom_call.1} parent=1 // pred_fallthru
      _
    // Predicated region
    $region22: #{tpu_custom_call.1} parent=1 // pred_check
      _
    $region23: #{tpu_custom_call.1} parent=1 // pred_check_branch
      %187 = sbr.rel (0) target = $region25
    $region24: #{tpu_custom_call.1} parent=1 // pred_region
      %188 = dma.done [#allocation4], 32
    $region25: #{tpu_custom_call.1} parent=1 // pred_fallthru
      _
    %189 = vsyncpa [#allocation3], 1
    %190 = vsyncpa [#allocation4], 1

</llo_original>
